<compile_context>
chip_gen: v5e
topology: v5e:2x2
jax: 0.10.0
libtpu: 0.0.40
codegen_flags: <defaults>
</compile_context>

<pallas_src>
import functools

import jax
import jax.numpy as jnp
import numpy as np
from jax.experimental import pallas as pl
from jax.experimental.pallas import tpu as pltpu


def _leaky_relu(v, slope=0.2):
    return jnp.where(v > 0, v, slope * v)


def _graph_conv_module_kernel(x_ref, adjt_ref, wh_ref, wb_ref, wt_ref, o_ref,
                              *, n_resgcn):
    # All activations live in the transposed layout H^T: (F, M) with
    # M = BCg * N on the lane axis (lane-dense, 128 at demo shapes).
    #
    # x_ref:    (1, 1, M)            node scores of this group, flattened (b, n)
    # adjt_ref: (M, M)               block-diag of adj^T (one adj block per slice)
    # wh_ref:   (F, 1)               W_head^T
    # wb_ref:   (2*n_resgcn, F, F)   stacked ResGCN weights, transposed
    # wt_ref:   (F, 1)               W_tail
    # o_ref:    (1, 1, M)            lane-dense output slab
    x_row = x_ref[0]            # (1, M)
    adjt = adjt_ref[...]        # (M, M)
    wh = wh_ref[...]            # (F, 1)
    wt = wt_ref[...]            # (F, 1)

    # ---- head: GraphConvolution(1, F) ----
    # (x @ W_head)^T is a rank-1 outer product -> VPU broadcast multiply,
    # keeping the MXU free (K=1 matmuls waste a full systolic pass).
    h = wh * x_row                                                   # (F, M)
    # (adj @ .)^T  ==  . @ adj^T   (single lane-dense MXU contraction)
    h = jnp.dot(h, adjt, preferred_element_type=jnp.float32)         # (F, M)

    # ---- body: n_ResGCN x ResGCN ----
    # Statically unrolled: n_resgcn is small (2).  For large n_ResGCN switch to
    # lax.fori_loop(..., unroll=True) with dynamic wb_ref indexing to bound
    # vreg live ranges.
    for i in range(n_resgcn):
        w1t = wb_ref[2 * i]                                          # (F, F) = W1^T
        w2t = wb_ref[2 * i + 1]                                      # (F, F) = W2^T
        g = jnp.dot(w1t, h, preferred_element_type=jnp.float32)      # (h @ W1)^T
        g = jnp.dot(g, adjt, preferred_element_type=jnp.float32)     # (adj @ .)^T
        g = _leaky_relu(g)
        g = jnp.dot(w2t, g, preferred_element_type=jnp.float32)      # (. @ W2)^T
        g = jnp.dot(g, adjt, preferred_element_type=jnp.float32)     # (adj @ .)^T
        h = h + g                                                    # residual (f32)

    # ---- tail: GraphConvolution(F, 1) + LeakyReLU(0.2) ----
    # (h @ W_tail)^T as a VPU multiply + XLU sublane reduction (no 1-lane MXU
    # result), then one lane-dense (1, M) @ (M, M) contraction for adj.
    s = jnp.sum(h * wt, axis=0, keepdims=True)                       # (1, M)
    t = jnp.dot(s, adjt, preferred_element_type=jnp.float32)         # (1, M)
    t = _leaky_relu(t)

    o_ref[0] = t.astype(o_ref.dtype)                                 # lane-dense store


def graph_conv_module(x, adj, w_head, w_body, w_tail, *, n_resgcn,
                      num_groups=None):
    """x: (B, C, N) f32, adj: (N, N) f32 -> (B, C, N) f32."""
    B, C, N = x.shape
    F = w_head.shape[1]
    BC = B * C

    if num_groups is None:
        # Use 2 group-steps (one per v7x TensorCore) only when each group still
        # keeps a lane-dense (>=128) flattened node axis; otherwise one single
        # invocation (the case at demo shapes: BC*N = 128 -> M = 128 lanes).
        num_groups = 2 if (BC % 2 == 0 and (BC // 2) * N >= 128) else 1
    assert BC % num_groups == 0, "num_groups must divide B*C"
    bcg = BC // num_groups
    M = bcg * N

    # Wrapper-side layout plumbing (pure metadata / tiny one-off XLA ops):
    #   x       -> (G, 1, M) lane-major rows (flat order b, n inside a group)
    #   adj     -> block-diagonal adj^T (M, M); applying it from the right on
    #              H^T (F, M) is exactly "adj @ h" for every slice at once.
    #   weights -> transposed so they apply from the left on H^T.
    # NOTE: blkdiag(adj^T) is (bcg*N)^2; for very large N / BC switch to more
    # groups (smaller bcg) or row-tile adj with a reduction grid axis.
    x_rows = x.reshape(num_groups, 1, M)
    adjt_blk = jnp.kron(jnp.eye(bcg, dtype=adj.dtype), adj.T)        # (M, M)
    w_head_t = w_head.T                                              # (F, 1)
    w_body_t = jnp.swapaxes(w_body, 1, 2)                            # (2R, F, F)

    kernel = functools.partial(_graph_conv_module_kernel, n_resgcn=n_resgcn)

    out = pl.pallas_call(
        kernel,
        out_shape=jax.ShapeDtypeStruct((num_groups, 1, M), x.dtype),
        grid_spec=pltpu.PrefetchScalarGridSpec(
            num_scalar_prefetch=0,
            grid=(num_groups,),
            in_specs=[
                pl.BlockSpec((1, 1, M), lambda g: (g, 0, 0)),                  # x rows
                pl.BlockSpec((M, M), lambda g: (0, 0)),                        # blkdiag adj^T
                pl.BlockSpec((F, 1), lambda g: (0, 0)),                        # w_head^T
                pl.BlockSpec((2 * n_resgcn, F, F), lambda g: (0, 0, 0)),       # body weights^T
                pl.BlockSpec((F, 1), lambda g: (0, 0)),                        # w_tail
            ],
            out_specs=pl.BlockSpec((1, 1, M), lambda g: (g, 0, 0)),
        ),
        compiler_params=pltpu.CompilerParams(
            dimension_semantics=("parallel",)),
    )(x_rows, adjt_blk, w_head_t, w_body_t, w_tail)

    return out.reshape(B, C, N)


def graph_conv_module_ref(x, adj, w_head, w_body, w_tail, *, n_resgcn):
    """Pure-JAX reference mirroring the PyTorch forward (untransposed order)."""
    h = x[..., None] @ w_head                                    # (B,C,N,F)
    h = jnp.einsum('ij,bcjf->bcif', adj, h)
    for i in range(n_resgcn):
        g = h @ w_body[2 * i]
        g = jnp.einsum('ij,bcjf->bcif', adj, g)
        g = _leaky_relu(g)
        g = g @ w_body[2 * i + 1]
        g = jnp.einsum('ij,bcjf->bcif', adj, g)
        h = h + g
    t = h @ w_tail
    t = jnp.einsum('ij,bcjf->bcif', adj, t)
    t = _leaky_relu(t)
    return t[..., 0]


if __name__ == "__main__":
    # Small shapes: batch=2, channels=4, nodes=16, graph features=32, 2 ResGCN blocks.
    B, C, N = 2, 4, 16
    n_graph_features = 32
    n_ResGCN = 2

    key = jax.random.PRNGKey(0)
    kx, kadj, kh, kb, kt = jax.random.split(key, 5)

    x = jax.random.normal(kx, (B, C, N), dtype=jnp.float32)
    # Row-normalized positive adjacency (stands in for gen_adj's D^-1/2 A D^-1/2
    # normalization and keeps intermediate magnitudes O(1)).
    adj = jax.random.uniform(kadj, (N, N), dtype=jnp.float32)
    adj = adj / jnp.sum(adj, axis=1, keepdims=True)
    # Deterministic synthetic parameters (PyTorch init is zeros -> degenerate;
    # use small random values so the kernel's compute is actually exercised).
    w_head = 0.1 * jax.random.normal(kh, (1, n_graph_features), dtype=jnp.float32)
    w_body = 0.1 * jax.random.normal(
        kb, (2 * n_ResGCN, n_graph_features, n_graph_features), dtype=jnp.float32)
    w_tail = 0.1 * jax.random.normal(kt, (n_graph_features, 1), dtype=jnp.float32)

    out = graph_conv_module(x, adj, w_head, w_body, w_tail, n_resgcn=n_ResGCN)
    out = jax.block_until_ready(out)

    ref = graph_conv_module_ref(x, adj, w_head, w_body, w_tail, n_resgcn=n_ResGCN)
    np.testing.assert_allclose(np.asarray(out), np.asarray(ref),
                               rtol=1e-5, atol=1e-5)

    print("KERNEL_OK")
</pallas_src>

<mosaic_0001>
module attributes {stable_mosaic.version = 11 : i64} {
  func.func @_graph_conv_module_kernel(%arg0: i32, %arg1: memref<1x1x128xf32, #tpu.memory_space<vmem>>, %arg2: memref<128x128xf32, #tpu.memory_space<vmem>>, %arg3: memref<32x1xf32, #tpu.memory_space<vmem>>, %arg4: memref<4x32x32xf32, #tpu.memory_space<vmem>>, %arg5: memref<32x1xf32, #tpu.memory_space<vmem>>, %arg6: memref<1x1x128xf32, #tpu.memory_space<vmem>>) attributes {dimension_semantics = [#tpu.dimension_semantics<parallel>], iteration_bounds = array<i64: 1>, scalar_prefetch = 0 : i64, scratch_operands = 0 : i64, tpu.core_type = #tpu.core_type<tc>, window_params = [{transform_indices = @transform_0, window_bounds = array<i64: 1, 1, 128>}, {pipeline_mode = #tpu.pipeline_mode<synchronous>, transform_indices = @transform_1, window_bounds = array<i64: 128, 128>}, {pipeline_mode = #tpu.pipeline_mode<synchronous>, transform_indices = @transform_2, window_bounds = array<i64: 32, 1>}, {pipeline_mode = #tpu.pipeline_mode<synchronous>, transform_indices = @transform_3, window_bounds = array<i64: 4, 32, 32>}, {pipeline_mode = #tpu.pipeline_mode<synchronous>, transform_indices = @transform_4, window_bounds = array<i64: 32, 1>}, {transform_indices = @transform_5, window_bounds = array<i64: 1, 1, 128>}]} {
    %c0 = arith.constant 0 : index
    %c0_0 = arith.constant 0 : index
    %c0_1 = arith.constant 0 : index
    %0 = vector.load %arg1[%c0, %c0_0, %c0_1] : memref<1x1x128xf32, #tpu.memory_space<vmem>>, vector<1x1x128xf32>
    %1 = vector.shape_cast %0 : vector<1x1x128xf32> to vector<1x128xf32>
    %c0_2 = arith.constant 0 : index
    %c0_3 = arith.constant 0 : index
    %2 = vector.load %arg2[%c0_2, %c0_3] : memref<128x128xf32, #tpu.memory_space<vmem>>, vector<128x128xf32>
    %c0_4 = arith.constant 0 : index
    %c0_5 = arith.constant 0 : index
    %3 = vector.load %arg3[%c0_4, %c0_5] : memref<32x1xf32, #tpu.memory_space<vmem>>, vector<32x1xf32>
    %c0_6 = arith.constant 0 : index
    %c0_7 = arith.constant 0 : index
    %4 = vector.load %arg5[%c0_6, %c0_7] : memref<32x1xf32, #tpu.memory_space<vmem>>, vector<32x1xf32>
    %5 = vector.broadcast %3 : vector<32x1xf32> to vector<32x128xf32>
    %6 = vector.broadcast %1 : vector<1x128xf32> to vector<32x128xf32>
    %7 = arith.mulf %5, %6 : vector<32x128xf32>
    %cst = arith.constant dense<0.000000e+00> : vector<32x128xf32>
    %8 = tpu.matmul %7, %2, %cst {dimension_numbers = #tpu.dot_dimension_numbers<[1], [0], [0], [1], [0, 0, 1, 1], [], []>} : vector<32x128xf32>, vector<128x128xf32>, vector<32x128xf32> -> vector<32x128xf32>
    %c0_8 = arith.constant 0 : index
    %c0_9 = arith.constant 0 : index
    %c0_10 = arith.constant 0 : index
    %9 = vector.load %arg4[%c0_8, %c0_9, %c0_10] : memref<4x32x32xf32, #tpu.memory_space<vmem>>, vector<1x32x32xf32>
    %10 = vector.shape_cast %9 : vector<1x32x32xf32> to vector<32x32xf32>
    %c1 = arith.constant 1 : index
    %c0_11 = arith.constant 0 : index
    %c0_12 = arith.constant 0 : index
    %11 = vector.load %arg4[%c1, %c0_11, %c0_12] : memref<4x32x32xf32, #tpu.memory_space<vmem>>, vector<1x32x32xf32>
    %12 = vector.shape_cast %11 : vector<1x32x32xf32> to vector<32x32xf32>
    %cst_13 = arith.constant dense<0.000000e+00> : vector<32x128xf32>
    %13 = tpu.matmul %10, %8, %cst_13 {dimension_numbers = #tpu.dot_dimension_numbers<[1], [0], [0], [1], [0, 0, 1, 1], [], []>} : vector<32x32xf32>, vector<32x128xf32>, vector<32x128xf32> -> vector<32x128xf32>
    %cst_14 = arith.constant dense<0.000000e+00> : vector<32x128xf32>
    %14 = tpu.matmul %13, %2, %cst_14 {dimension_numbers = #tpu.dot_dimension_numbers<[1], [0], [0], [1], [0, 0, 1, 1], [], []>} : vector<32x128xf32>, vector<128x128xf32>, vector<32x128xf32> -> vector<32x128xf32>
    %cst_15 = arith.constant 0.000000e+00 : f32
    %15 = vector.broadcast %cst_15 : f32 to vector<32x128xf32>
    %16 = arith.cmpf ogt, %14, %15 : vector<32x128xf32>
    %cst_16 = arith.constant 2.000000e-01 : f32
    %17 = vector.broadcast %cst_16 : f32 to vector<32x128xf32>
    %18 = arith.mulf %17, %14 : vector<32x128xf32>
    %19 = arith.select %16, %14, %18 : vector<32x128xi1>, vector<32x128xf32>
    %cst_17 = arith.constant dense<0.000000e+00> : vector<32x128xf32>
    %20 = tpu.matmul %12, %19, %cst_17 {dimension_numbers = #tpu.dot_dimension_numbers<[1], [0], [0], [1], [0, 0, 1, 1], [], []>} : vector<32x32xf32>, vector<32x128xf32>, vector<32x128xf32> -> vector<32x128xf32>
    %cst_18 = arith.constant dense<0.000000e+00> : vector<32x128xf32>
    %21 = tpu.matmul %20, %2, %cst_18 {dimension_numbers = #tpu.dot_dimension_numbers<[1], [0], [0], [1], [0, 0, 1, 1], [], []>} : vector<32x128xf32>, vector<128x128xf32>, vector<32x128xf32> -> vector<32x128xf32>
    %22 = arith.addf %8, %21 : vector<32x128xf32>
    %c2 = arith.constant 2 : index
    %c0_19 = arith.constant 0 : index
    %c0_20 = arith.constant 0 : index
    %23 = vector.load %arg4[%c2, %c0_19, %c0_20] : memref<4x32x32xf32, #tpu.memory_space<vmem>>, vector<1x32x32xf32>
    %24 = vector.shape_cast %23 : vector<1x32x32xf32> to vector<32x32xf32>
    %c3 = arith.constant 3 : index
    %c0_21 = arith.constant 0 : index
    %c0_22 = arith.constant 0 : index
    %25 = vector.load %arg4[%c3, %c0_21, %c0_22] : memref<4x32x32xf32, #tpu.memory_space<vmem>>, vector<1x32x32xf32>
    %26 = vector.shape_cast %25 : vector<1x32x32xf32> to vector<32x32xf32>
    %cst_23 = arith.constant dense<0.000000e+00> : vector<32x128xf32>
    %27 = tpu.matmul %24, %22, %cst_23 {dimension_numbers = #tpu.dot_dimension_numbers<[1], [0], [0], [1], [0, 0, 1, 1], [], []>} : vector<32x32xf32>, vector<32x128xf32>, vector<32x128xf32> -> vector<32x128xf32>
    %cst_24 = arith.constant dense<0.000000e+00> : vector<32x128xf32>
    %28 = tpu.matmul %27, %2, %cst_24 {dimension_numbers = #tpu.dot_dimension_numbers<[1], [0], [0], [1], [0, 0, 1, 1], [], []>} : vector<32x128xf32>, vector<128x128xf32>, vector<32x128xf32> -> vector<32x128xf32>
    %cst_25 = arith.constant 0.000000e+00 : f32
    %29 = vector.broadcast %cst_25 : f32 to vector<32x128xf32>
    %30 = arith.cmpf ogt, %28, %29 : vector<32x128xf32>
    %cst_26 = arith.constant 2.000000e-01 : f32
    %31 = vector.broadcast %cst_26 : f32 to vector<32x128xf32>
    %32 = arith.mulf %31, %28 : vector<32x128xf32>
    %33 = arith.select %30, %28, %32 : vector<32x128xi1>, vector<32x128xf32>
    %cst_27 = arith.constant dense<0.000000e+00> : vector<32x128xf32>
    %34 = tpu.matmul %26, %33, %cst_27 {dimension_numbers = #tpu.dot_dimension_numbers<[1], [0], [0], [1], [0, 0, 1, 1], [], []>} : vector<32x32xf32>, vector<32x128xf32>, vector<32x128xf32> -> vector<32x128xf32>
    %cst_28 = arith.constant dense<0.000000e+00> : vector<32x128xf32>
    %35 = tpu.matmul %34, %2, %cst_28 {dimension_numbers = #tpu.dot_dimension_numbers<[1], [0], [0], [1], [0, 0, 1, 1], [], []>} : vector<32x128xf32>, vector<128x128xf32>, vector<32x128xf32> -> vector<32x128xf32>
    %36 = arith.addf %22, %35 : vector<32x128xf32>
    %37 = vector.broadcast %4 : vector<32x1xf32> to vector<32x128xf32>
    %38 = arith.mulf %36, %37 : vector<32x128xf32>
    %cst_29 = arith.constant dense<0.000000e+00> : vector<128xf32>
    %39 = vector.multi_reduction <add>, %38, %cst_29 [0] : vector<32x128xf32> to vector<128xf32>
    %40 = vector.shape_cast %39 : vector<128xf32> to vector<1x128xf32>
    %cst_30 = arith.constant dense<0.000000e+00> : vector<1x128xf32>
    %41 = tpu.matmul %40, %2, %cst_30 {dimension_numbers = #tpu.dot_dimension_numbers<[1], [0], [0], [1], [0, 0, 1, 1], [], []>} : vector<1x128xf32>, vector<128x128xf32>, vector<1x128xf32> -> vector<1x128xf32>
    %cst_31 = arith.constant 0.000000e+00 : f32
    %42 = vector.broadcast %cst_31 : f32 to vector<1x128xf32>
    %43 = arith.cmpf ogt, %41, %42 : vector<1x128xf32>
    %cst_32 = arith.constant 2.000000e-01 : f32
    %44 = vector.broadcast %cst_32 : f32 to vector<1x128xf32>
    %45 = arith.mulf %44, %41 : vector<1x128xf32>
    %46 = arith.select %43, %41, %45 : vector<1x128xi1>, vector<1x128xf32>
    %c0_33 = arith.constant 0 : index
    %c0_34 = arith.constant 0 : index
    %c0_35 = arith.constant 0 : index
    %47 = vector.load %arg6[%c0_33, %c0_34, %c0_35] : memref<1x1x128xf32, #tpu.memory_space<vmem>>, vector<1x1x128xf32>
    %48 = vector.shape_cast %47 : vector<1x1x128xf32> to vector<1x128xf32>
    %49 = vector.shape_cast %46 : vector<1x128xf32> to vector<1x1x128xf32>
    tpu.vector_store %arg6[%c0_33, %c0_34, %c0_35], %49 {strides = array<i32>} : memref<1x1x128xf32, #tpu.memory_space<vmem>>, vector<1x1x128xf32>,
    return
  }
  func.func @transform_0(%arg0: i32) -> (i32, i32, i32) {
    %c0_i32 = arith.constant 0 : i32
    %c0_i32_0 = arith.constant 0 : i32
    %c0_i32_1 = arith.constant 0 : i32
    return %arg0, %c0_i32, %c0_i32_0 : i32, i32, i32
  }
  func.func @transform_1(%arg0: i32) -> (i32, i32) {
    %c0_i32 = arith.constant 0 : i32
    %c0_i32_0 = arith.constant 0 : i32
    %c0_i32_1 = arith.constant 0 : i32
    return %c0_i32, %c0_i32_0 : i32, i32
  }
  func.func @transform_2(%arg0: i32) -> (i32, i32) {
    %c0_i32 = arith.constant 0 : i32
    %c0_i32_0 = arith.constant 0 : i32
    %c0_i32_1 = arith.constant 0 : i32
    return %c0_i32, %c0_i32_0 : i32, i32
  }
  func.func @transform_3(%arg0: i32) -> (i32, i32, i32) {
    %c0_i32 = arith.constant 0 : i32
    %c0_i32_0 = arith.constant 0 : i32
    %c0_i32_1 = arith.constant 0 : i32
    %c0_i32_2 = arith.constant 0 : i32
    return %c0_i32, %c0_i32_0, %c0_i32_1 : i32, i32, i32
  }
  func.func @transform_4(%arg0: i32) -> (i32, i32) {
    %c0_i32 = arith.constant 0 : i32
    %c0_i32_0 = arith.constant 0 : i32
    %c0_i32_1 = arith.constant 0 : i32
    return %c0_i32, %c0_i32_0 : i32, i32
  }
  func.func @transform_5(%arg0: i32) -> (i32, i32, i32) {
    %c0_i32 = arith.constant 0 : i32
    %c0_i32_0 = arith.constant 0 : i32
    %c0_i32_1 = arith.constant 0 : i32
    return %arg0, %c0_i32, %c0_i32_0 : i32, i32, i32
  }
}

</mosaic_0001>

<llo_original>
// kernel: tpu_custom_call.1
$region0: #{tpu_custom_call.1}
  #allocation0 [shape = 'u32[]', space=smem, size = 0x4, offset = 0x4, fixed_abs, tag = 'smem constant byte address 0x4 - core index']
  #allocation1 [shape = 'u32[72,128]{1,0:T(1,128)}', space=vmem, size = 0x9000, scoped, tag = 'internal scratch']
  %s0 = inlined_call_operand.vmem [shape: f32[1,1,128], index: 0, kind: input, shape index: {}]
  %s1 = inlined_call_operand.hbm [shape: f32[128,128], index: 1, kind: input, shape index: {}]
  %s2 = inlined_call_operand.vmem [shape: f32[32,1], index: 2, kind: input, shape index: {}]
  %s3 = inlined_call_operand.hbm [shape: f32[4,32,32], index: 3, kind: input, shape index: {}]
  %s4 = inlined_call_operand.vmem [shape: f32[32,1], index: 4, kind: input, shape index: {}]
  %s5 = inlined_call_operand.hbm [shape: f32[1,1,128], index: 5, kind: output, shape index: {}]
  %s6 = sld [smem:[#allocation0]]
  $region38: #{tpu_custom_call.1} parent=0
    _
  %s8 = ssub.s32 1, %s6
  %s9 = scalar_select 0, %s8, %s6
  $region1: #{tpu_custom_call.1} parent=0
    #allocation2 [shape = 'u8[65536]{0}', space=vmem, size = 0x10000, scoped, tag = 'input window, operand 1, single buffered']
    #allocation3 [shape = 's32[1]{0}', space=sflag, size = 0x4, scoped, tag = 'scoped memory for tpu_custom_call.1']
    #allocation4 [shape = 's32[1]{0}', space=sflag, size = 0x4, scoped, tag = 'scoped memory for tpu_custom_call.1']
    #allocation5 [shape = 'u8[65536]{0}', space=vmem, size = 0x10000, scoped, tag = 'input window, operand 3, single buffered']
    #allocation6 [shape = 's32[1]{0}', space=sflag, size = 0x4, scoped, tag = 'scoped memory for tpu_custom_call.1']
    #allocation7 [shape = 'u8[512]{0}', space=vmem, size = 0x400, scoped, tag = 'output window, operand 0, single buffered']
    %10 = vsyncpa [#allocation3], 0
    %11 = vsyncpa [#allocation6], 0
    %12 = vsyncpa [#allocation4], 0
    // Predicated region
    $region2: #{tpu_custom_call.1} parent=1 // pred_check
      _
    $region3: #{tpu_custom_call.1} parent=1 // pred_check_branch
      %14 = sbr.rel (0) target = $region5
    $region4: #{tpu_custom_call.1} parent=1 // pred_region
      _
    $region5: #{tpu_custom_call.1} parent=1 // pred_fallthru
      _
    // Predicated region
    $region6: #{tpu_custom_call.1} parent=1 // pred_check
      _
    $region7: #{tpu_custom_call.1} parent=1 // pred_check_branch
      %16 = sbr.rel (0) target = $region9
    $region8: #{tpu_custom_call.1} parent=1 // pred_region
      %18 = vsyncadd [#allocation3], 0
      %s19 = sshll.u32 %s1, 4
      %s20 = int_to_ptr.hbm [resolvable:$true] %s19
      %s21 = sshll.u32 [#allocation2], 4
      %s22 = int_to_ptr.vmem [resolvable:$true] %s21
      %27 = dma.hbm_to_vmem [thread:$0]  %s20, 2048, %s22, [#allocation3], 128, 128, 8
    $region9: #{tpu_custom_call.1} parent=1 // pred_fallthru
      _
    // Predicated region
    $region10: #{tpu_custom_call.1} parent=1 // pred_check
      _
    $region11: #{tpu_custom_call.1} parent=1 // pred_check_branch
      %29 = sbr.rel (0) target = $region13
    $region12: #{tpu_custom_call.1} parent=1 // pred_region
      _
    $region13: #{tpu_custom_call.1} parent=1 // pred_fallthru
      _
    // Predicated region
    $region14: #{tpu_custom_call.1} parent=1 // pred_check
      _
    $region15: #{tpu_custom_call.1} parent=1 // pred_check_branch
      %31 = sbr.rel (0) target = $region17
    $region16: #{tpu_custom_call.1} parent=1 // pred_region
      %33 = vsyncadd [#allocation6], 0
      %s34 = sshll.u32 %s3, 4
      %s35 = int_to_ptr.hbm [resolvable:$true] %s34
      %s36 = sshll.u32 [#allocation5], 4
      %s37 = int_to_ptr.vmem [resolvable:$true] %s36
      %42 = dma.hbm_to_vmem [thread:$0]  %s35, 2048, %s37, [#allocation6], 128, 128, 8
    $region17: #{tpu_custom_call.1} parent=1 // pred_fallthru
      _
    // Predicated region
    $region18: #{tpu_custom_call.1} parent=1 // pred_check
      _
    $region19: #{tpu_custom_call.1} parent=1 // pred_check_branch
      %44 = sbr.rel (0) target = $region21
    $region20: #{tpu_custom_call.1} parent=1 // pred_region
      _
    $region21: #{tpu_custom_call.1} parent=1 // pred_fallthru
      _
    // Predicated region
    $region22: #{tpu_custom_call.1} parent=1 // pred_check
      _
    $region23: #{tpu_custom_call.1} parent=1 // pred_check_branch
      %46 = sbr.rel (0) target = $region25
    $region24: #{tpu_custom_call.1} parent=1 // pred_region
      %48 = dma.done [#allocation3], 2048
    $region25: #{tpu_custom_call.1} parent=1 // pred_fallthru
      _
    // Predicated region
    $region26: #{tpu_custom_call.1} parent=1 // pred_check
      _
    $region27: #{tpu_custom_call.1} parent=1 // pred_check_branch
      %50 = sbr.rel (0) target = $region29
    $region28: #{tpu_custom_call.1} parent=1 // pred_region
      %52 = dma.done [#allocation6], 2048
    $region29: #{tpu_custom_call.1} parent=1 // pred_fallthru
      _
    %v53 = vld [vmem:[%s0] sm:$0x1]
    %v54 = vld [vmem:[#allocation2] sm:$0xff]
    %v55 = vld [vmem:[#allocation2 + $0x8] sm:$0xff]
    %v56 = vld [vmem:[#allocation2 + $0x10] sm:$0xff]
    %v57 = vld [vmem:[#allocation2 + $0x18] sm:$0xff]
    %v58 = vld [vmem:[#allocation2 + $0x20] sm:$0xff]
    %v59 = vld [vmem:[#allocation2 + $0x28] sm:$0xff]
    %v60 = vld [vmem:[#allocation2 + $0x30] sm:$0xff]
    %v61 = vld [vmem:[#allocation2 + $0x38] sm:$0xff]
    %v62 = vld [vmem:[#allocation2 + $0x40] sm:$0xff]
    %v63 = vld [vmem:[#allocation2 + $0x48] sm:$0xff]
    %v64 = vld [vmem:[#allocation2 + $0x50] sm:$0xff]
    %v65 = vld [vmem:[#allocation2 + $0x58] sm:$0xff]
    %v66 = vld [vmem:[#allocation2 + $0x60] sm:$0xff]
    %v67 = vld [vmem:[#allocation2 + $0x68] sm:$0xff]
    %v68 = vld [vmem:[#allocation2 + $0x70] sm:$0xff]
    %v69 = vld [vmem:[#allocation2 + $0x78] sm:$0xff]
    %v70 = vld [vmem:[%s2] sm:$0xff]
    %v71 = vld [vmem:[%s2 + $0x8] sm:$0xff]
    %v72 = vld [vmem:[%s2 + $0x10] sm:$0xff]
    %v73 = vld [vmem:[%s2 + $0x18] sm:$0xff]
    %v74 = vld [vmem:[%s4] sm:$0xff]
    %v75 = vld [vmem:[%s4 + $0x8] sm:$0xff]
    %v76 = vld [vmem:[%s4 + $0x10] sm:$0xff]
    %v77 = vld [vmem:[%s4 + $0x18] sm:$0xff]
    %79 = vset.pattern.permute.xlu0 0
    %80 = vperm.xlu0 %79, %v70
    %v81 = vpop.permute.xlu0 %80
    %84 = vset.pattern.permute.xlu0 0
    %85 = vperm.xlu0 %84, %v71
    %v86 = vpop.permute.xlu0 %85
    %89 = vset.pattern.permute.xlu0 0
    %90 = vperm.xlu0 %89, %v72
    %v91 = vpop.permute.xlu0 %90
    %94 = vset.pattern.permute.xlu0 0
    %95 = vperm.xlu0 %94, %v73
    %v96 = vpop.permute.xlu0 %95
    %v99 = vperm.slane %v53, 0
    %v101 = vmul.f32 %v81, %v99
    %v102 = vmul.f32 %v86, %v99
    %v103 = vmul.f32 %v91, %v99
    %v104 = vmul.f32 %v96, %v99
    %105 = vmatpush.msra.mxu0 %v69
    %106 = vmatpush.msra.mxu0 %v68
    %107 = vmatpush.msra.mxu0 %v67
    %108 = vmatpush.msra.mxu0 %v66
    %109 = vmatpush.msra.mxu0 %v65
    %110 = vmatpush.msra.mxu0 %v64
    %111 = vmatpush.msra.mxu0 %v63
    %112 = vmatpush.msra.mxu0 %v62
    %113 = vmatpush.msra.mxu0 %v61
    %114 = vmatpush.msra.mxu0 %v60
    %115 = vmatpush.msra.mxu0 %v59
    %116 = vmatpush.msra.mxu0 %v58
    %117 = vmatpush.msra.mxu0 %v57
    %118 = vmatpush.msra.mxu0 %v56
    %119 = vmatpush.msra.mxu0 %v55
    %120 = vmatpush.msra.mxu0 %v54
    %121 = vmatmul.f32.gmra.mxu0 %v101
    %v122 = vpop.f32.mrf.mxu0
    %v123 = vadd.f32 0.0, %v122
    %124 = vmatmul.f32.gmra.mxu0 %v102
    %v125 = vpop.f32.mrf.mxu0
    %v126 = vadd.f32 0.0, %v125
    %127 = vmatmul.f32.gmra.mxu0 %v103
    %v128 = vpop.f32.mrf.mxu0
    %v129 = vadd.f32 0.0, %v128
    %130 = vmatmul.f32.gmra.mxu0 %v104
    %v131 = vpop.f32.mrf.mxu0
    %v132 = vadd.f32 0.0, %v131
    %133 = vdwg.mxu0
    %v134 = vld [vmem:[#allocation5] sm:$0xff]
    %v135 = vld [vmem:[#allocation5 + $0x8] sm:$0xff]
    %v136 = vld [vmem:[#allocation5 + $0x10] sm:$0xff]
    %v137 = vld [vmem:[#allocation5 + $0x18] sm:$0xff]
    %s138 = scalar_lea.vmem [#allocation5], 32
    %v139 = vld [vmem:[%s138] sm:$0xff]
    %v140 = vld [vmem:[%s138 + $0x8] sm:$0xff]
    %v141 = vld [vmem:[%s138 + $0x10] sm:$0xff]
    %v142 = vld [vmem:[%s138 + $0x18] sm:$0xff]
    %vm143 = vcmask 261120
    %v145 = vsel %vm143, %v134, 0
    %v148 = vsel %vm143, %v135, 0
    %v151 = vsel %vm143, %v136, 0
    %v154 = vsel %vm143, %v137, 0
    %156 = vmatpush.msra.mxu0 0.0
    %157 = vmatpush.msra.mxu0 0.0
    %158 = vmatpush.msra.mxu0 0.0
    %159 = vmatpush.msra.mxu0 0.0
    %160 = vmatpush.msra.mxu0 0.0
    %161 = vmatpush.msra.mxu0 0.0
    %162 = vmatpush.msra.mxu0 0.0
    %163 = vmatpush.msra.mxu0 0.0
    %164 = vmatpush.msra.mxu0 0.0
    %165 = vmatpush.msra.mxu0 0.0
    %166 = vmatpush.msra.mxu0 0.0
    %167 = vmatpush.msra.mxu0 0.0
    %168 = vmatpush.msra.mxu0 %v132
    %169 = vmatpush.msra.mxu0 %v129
    %170 = vmatpush.msra.mxu0 %v126
    %171 = vmatpush.msra.mxu0 %v123
    %172 = vmatmul.f32.gmra.mxu0 %v145
    %v173 = vpop.f32.mrf.mxu0
    %v174 = vadd.f32 0.0, %v173
    %175 = vmatmul.f32.gmra.mxu0 %v148
    %v176 = vpop.f32.mrf.mxu0
    %v177 = vadd.f32 0.0, %v176
    %178 = vmatmul.f32.gmra.mxu0 %v151
    %v179 = vpop.f32.mrf.mxu0
    %v180 = vadd.f32 0.0, %v179
    %181 = vmatmul.f32.gmra.mxu0 %v154
    %v182 = vpop.f32.mrf.mxu0
    %v183 = vadd.f32 0.0, %v182
    %184 = vdwg.mxu0
    %185 = vmatpush.msra.mxu0 %v69
    %186 = vmatpush.msra.mxu0 %v68
    %187 = vmatpush.msra.mxu0 %v67
    %188 = vmatpush.msra.mxu0 %v66
    %189 = vmatpush.msra.mxu0 %v65
    %190 = vmatpush.msra.mxu0 %v64
    %191 = vmatpush.msra.mxu0 %v63
    %192 = vmatpush.msra.mxu0 %v62
    %193 = vmatpush.msra.mxu0 %v61
    %194 = vmatpush.msra.mxu0 %v60
    %195 = vmatpush.msra.mxu0 %v59
    %196 = vmatpush.msra.mxu0 %v58
    %197 = vmatpush.msra.mxu0 %v57
    %198 = vmatpush.msra.mxu0 %v56
    %199 = vmatpush.msra.mxu0 %v55
    %200 = vmatpush.msra.mxu0 %v54
    %201 = vmatmul.f32.gmra.mxu0 %v174
    %v202 = vpop.f32.mrf.mxu0
    %v203 = vadd.f32 0.0, %v202
    %204 = vmatmul.f32.gmra.mxu0 %v177
    %v205 = vpop.f32.mrf.mxu0
    %v206 = vadd.f32 0.0, %v205
    %207 = vmatmul.f32.gmra.mxu0 %v180
    %v208 = vpop.f32.mrf.mxu0
    %v209 = vadd.f32 0.0, %v208
    %210 = vmatmul.f32.gmra.mxu0 %v183
    %v211 = vpop.f32.mrf.mxu0
    %v212 = vadd.f32 0.0, %v211
    %213 = vdwg.mxu0
    %vm214 = vcmp.gt.f32.partialorder %v203, 0.0
    %vm215 = vcmp.gt.f32.partialorder %v206, 0.0
    %vm216 = vcmp.gt.f32.partialorder %v209, 0.0
    %vm217 = vcmp.gt.f32.partialorder %v212, 0.0
    %v218 = vmul.f32 %v203, 0.2
    %v219 = vmul.f32 %v206, 0.2
    %v220 = vmul.f32 %v209, 0.2
    %v221 = vmul.f32 %v212, 0.2
    %v222 = vsel %vm214, %v203, %v218
    %v223 = vsel %vm215, %v206, %v219
    %v224 = vsel %vm216, %v209, %v220
    %v225 = vsel %vm217, %v212, %v221
    %v227 = vsel %vm143, %v139, 0
    %v230 = vsel %vm143, %v140, 0
    %v233 = vsel %vm143, %v141, 0
    %v236 = vsel %vm143, %v142, 0
    %238 = vmatpush.msra.mxu0 0.0
    %239 = vmatpush.msra.mxu0 0.0
    %240 = vmatpush.msra.mxu0 0.0
    %241 = vmatpush.msra.mxu0 0.0
    %242 = vmatpush.msra.mxu0 0.0
    %243 = vmatpush.msra.mxu0 0.0
    %244 = vmatpush.msra.mxu0 0.0
    %245 = vmatpush.msra.mxu0 0.0
    %246 = vmatpush.msra.mxu0 0.0
    %247 = vmatpush.msra.mxu0 0.0
    %248 = vmatpush.msra.mxu0 0.0
    %249 = vmatpush.msra.mxu0 0.0
    %250 = vmatpush.msra.mxu0 %v225
    %251 = vmatpush.msra.mxu0 %v224
    %252 = vmatpush.msra.mxu0 %v223
    %253 = vmatpush.msra.mxu0 %v222
    %254 = vmatmul.f32.gmra.mxu0 %v227
    %v255 = vpop.f32.mrf.mxu0
    %v256 = vadd.f32 0.0, %v255
    %257 = vmatmul.f32.gmra.mxu0 %v230
    %v258 = vpop.f32.mrf.mxu0
    %v259 = vadd.f32 0.0, %v258
    %260 = vmatmul.f32.gmra.mxu0 %v233
    %v261 = vpop.f32.mrf.mxu0
    %v262 = vadd.f32 0.0, %v261
    %263 = vmatmul.f32.gmra.mxu0 %v236
    %v264 = vpop.f32.mrf.mxu0
    %v265 = vadd.f32 0.0, %v264
    %266 = vdwg.mxu0
    %267 = vmatpush.msra.mxu0 %v69
    %268 = vmatpush.msra.mxu0 %v68
    %269 = vmatpush.msra.mxu0 %v67
    %270 = vmatpush.msra.mxu0 %v66
    %271 = vmatpush.msra.mxu0 %v65
    %272 = vmatpush.msra.mxu0 %v64
    %273 = vmatpush.msra.mxu0 %v63
    %274 = vmatpush.msra.mxu0 %v62
    %275 = vmatpush.msra.mxu0 %v61
    %276 = vmatpush.msra.mxu0 %v60
    %277 = vmatpush.msra.mxu0 %v59
    %278 = vmatpush.msra.mxu0 %v58
    %279 = vmatpush.msra.mxu0 %v57
    %280 = vmatpush.msra.mxu0 %v56
    %281 = vmatpush.msra.mxu0 %v55
    %282 = vmatpush.msra.mxu0 %v54
    %283 = vmatmul.f32.gmra.mxu0 %v256
    %v284 = vpop.f32.mrf.mxu0
    %v285 = vadd.f32 0.0, %v284
    %286 = vmatmul.f32.gmra.mxu0 %v259
    %v287 = vpop.f32.mrf.mxu0
    %v288 = vadd.f32 0.0, %v287
    %289 = vmatmul.f32.gmra.mxu0 %v262
    %v290 = vpop.f32.mrf.mxu0
    %v291 = vadd.f32 0.0, %v290
    %292 = vmatmul.f32.gmra.mxu0 %v265
    %v293 = vpop.f32.mrf.mxu0
    %v294 = vadd.f32 0.0, %v293
    %295 = vdwg.mxu0
    %v296 = vadd.f32 %v123, %v285
    %v297 = vadd.f32 %v126, %v288
    %v298 = vadd.f32 %v129, %v291
    %v299 = vadd.f32 %v132, %v294
    %s300 = scalar_lea.vmem [#allocation5], 64
    %v301 = vld [vmem:[%s300] sm:$0xff]
    %v302 = vld [vmem:[%s300 + $0x8] sm:$0xff]
    %v303 = vld [vmem:[%s300 + $0x10] sm:$0xff]
    %v304 = vld [vmem:[%s300 + $0x18] sm:$0xff]
    %s305 = scalar_lea.vmem [#allocation5], 96
    %v306 = vld [vmem:[%s305] sm:$0xff]
    %v307 = vld [vmem:[%s305 + $0x8] sm:$0xff]
    %v308 = vld [vmem:[%s305 + $0x10] sm:$0xff]
    %v309 = vld [vmem:[%s305 + $0x18] sm:$0xff]
    %v311 = vsel %vm143, %v301, 0
    %v314 = vsel %vm143, %v302, 0
    %v317 = vsel %vm143, %v303, 0
    %v320 = vsel %vm143, %v304, 0
    %322 = vmatpush.msra.mxu0 0.0
    %323 = vmatpush.msra.mxu0 0.0
    %324 = vmatpush.msra.mxu0 0.0
    %325 = vmatpush.msra.mxu0 0.0
    %326 = vmatpush.msra.mxu0 0.0
    %327 = vmatpush.msra.mxu0 0.0
    %328 = vmatpush.msra.mxu0 0.0
    %329 = vmatpush.msra.mxu0 0.0
    %330 = vmatpush.msra.mxu0 0.0
    %331 = vmatpush.msra.mxu0 0.0
    %332 = vmatpush.msra.mxu0 0.0
    %333 = vmatpush.msra.mxu0 0.0
    %334 = vmatpush.msra.mxu0 %v299
    %335 = vmatpush.msra.mxu0 %v298
    %336 = vmatpush.msra.mxu0 %v297
    %337 = vmatpush.msra.mxu0 %v296
    %338 = vmatmul.f32.gmra.mxu0 %v311
    %v339 = vpop.f32.mrf.mxu0
    %v340 = vadd.f32 0.0, %v339
    %341 = vmatmul.f32.gmra.mxu0 %v314
    %v342 = vpop.f32.mrf.mxu0
    %v343 = vadd.f32 0.0, %v342
    %344 = vmatmul.f32.gmra.mxu0 %v317
    %v345 = vpop.f32.mrf.mxu0
    %v346 = vadd.f32 0.0, %v345
    %347 = vmatmul.f32.gmra.mxu0 %v320
    %v348 = vpop.f32.mrf.mxu0
    %v349 = vadd.f32 0.0, %v348
    %350 = vdwg.mxu0
    %351 = vmatpush.msra.mxu0 %v69
    %352 = vmatpush.msra.mxu0 %v68
    %353 = vmatpush.msra.mxu0 %v67
    %354 = vmatpush.msra.mxu0 %v66
    %355 = vmatpush.msra.mxu0 %v65
    %356 = vmatpush.msra.mxu0 %v64
    %357 = vmatpush.msra.mxu0 %v63
    %358 = vmatpush.msra.mxu0 %v62
    %359 = vmatpush.msra.mxu0 %v61
    %360 = vmatpush.msra.mxu0 %v60
    %361 = vmatpush.msra.mxu0 %v59
    %362 = vmatpush.msra.mxu0 %v58
    %363 = vmatpush.msra.mxu0 %v57
    %364 = vmatpush.msra.mxu0 %v56
    %365 = vmatpush.msra.mxu0 %v55
    %366 = vmatpush.msra.mxu0 %v54
    %367 = vmatmul.f32.gmra.mxu0 %v340
    %v368 = vpop.f32.mrf.mxu0
    %v369 = vadd.f32 0.0, %v368
    %370 = vmatmul.f32.gmra.mxu0 %v343
    %v371 = vpop.f32.mrf.mxu0
    %v372 = vadd.f32 0.0, %v371
    %373 = vmatmul.f32.gmra.mxu0 %v346
    %v374 = vpop.f32.mrf.mxu0
    %v375 = vadd.f32 0.0, %v374
    %376 = vmatmul.f32.gmra.mxu0 %v349
    %v377 = vpop.f32.mrf.mxu0
    %v378 = vadd.f32 0.0, %v377
    %379 = vdwg.mxu0
    %vm380 = vcmp.gt.f32.partialorder %v369, 0.0
    %vm381 = vcmp.gt.f32.partialorder %v372, 0.0
    %vm382 = vcmp.gt.f32.partialorder %v375, 0.0
    %vm383 = vcmp.gt.f32.partialorder %v378, 0.0
    %v384 = vmul.f32 %v369, 0.2
    %v385 = vmul.f32 %v372, 0.2
    %v386 = vmul.f32 %v375, 0.2
    %v387 = vmul.f32 %v378, 0.2
    %v388 = vsel %vm380, %v369, %v384
    %v389 = vsel %vm381, %v372, %v385
    %v390 = vsel %vm382, %v375, %v386
    %v391 = vsel %vm383, %v378, %v387
    %v393 = vsel %vm143, %v306, 0
    %v396 = vsel %vm143, %v307, 0
    %v399 = vsel %vm143, %v308, 0
    %v402 = vsel %vm143, %v309, 0
    %404 = vmatpush.msra.mxu0 0.0
    %405 = vmatpush.msra.mxu0 0.0
    %406 = vmatpush.msra.mxu0 0.0
    %407 = vmatpush.msra.mxu0 0.0
    %408 = vmatpush.msra.mxu0 0.0
    %409 = vmatpush.msra.mxu0 0.0
    %410 = vmatpush.msra.mxu0 0.0
    %411 = vmatpush.msra.mxu0 0.0
    %412 = vmatpush.msra.mxu0 0.0
    %413 = vmatpush.msra.mxu0 0.0
    %414 = vmatpush.msra.mxu0 0.0
    %415 = vmatpush.msra.mxu0 0.0
    %416 = vmatpush.msra.mxu0 %v391
    %417 = vmatpush.msra.mxu0 %v390
    %418 = vmatpush.msra.mxu0 %v389
    %419 = vmatpush.msra.mxu0 %v388
    %420 = vmatmul.f32.gmra.mxu0 %v393
    %v421 = vpop.f32.mrf.mxu0
    %v422 = vadd.f32 0.0, %v421
    %423 = vmatmul.f32.gmra.mxu0 %v396
    %v424 = vpop.f32.mrf.mxu0
    %v425 = vadd.f32 0.0, %v424
    %426 = vmatmul.f32.gmra.mxu0 %v399
    %v427 = vpop.f32.mrf.mxu0
    %v428 = vadd.f32 0.0, %v427
    %429 = vmatmul.f32.gmra.mxu0 %v402
    %v430 = vpop.f32.mrf.mxu0
    %v431 = vadd.f32 0.0, %v430
    %432 = vdwg.mxu0
    %433 = vmatpush.msra.mxu0 %v69
    %434 = vmatpush.msra.mxu0 %v68
    %435 = vmatpush.msra.mxu0 %v67
    %436 = vmatpush.msra.mxu0 %v66
    %437 = vmatpush.msra.mxu0 %v65
    %438 = vmatpush.msra.mxu0 %v64
    %439 = vmatpush.msra.mxu0 %v63
    %440 = vmatpush.msra.mxu0 %v62
    %441 = vmatpush.msra.mxu0 %v61
    %442 = vmatpush.msra.mxu0 %v60
    %443 = vmatpush.msra.mxu0 %v59
    %444 = vmatpush.msra.mxu0 %v58
    %445 = vmatpush.msra.mxu0 %v57
    %446 = vmatpush.msra.mxu0 %v56
    %447 = vmatpush.msra.mxu0 %v55
    %448 = vmatpush.msra.mxu0 %v54
    %449 = vmatmul.f32.gmra.mxu0 %v422
    %v450 = vpop.f32.mrf.mxu0
    %v451 = vadd.f32 0.0, %v450
    %452 = vmatmul.f32.gmra.mxu0 %v425
    %v453 = vpop.f32.mrf.mxu0
    %v454 = vadd.f32 0.0, %v453
    %455 = vmatmul.f32.gmra.mxu0 %v428
    %v456 = vpop.f32.mrf.mxu0
    %v457 = vadd.f32 0.0, %v456
    %458 = vmatmul.f32.gmra.mxu0 %v431
    %v459 = vpop.f32.mrf.mxu0
    %v460 = vadd.f32 0.0, %v459
    %461 = vdwg.mxu0
    %v462 = vadd.f32 %v296, %v451
    %v463 = vadd.f32 %v297, %v454
    %v464 = vadd.f32 %v298, %v457
    %v465 = vadd.f32 %v299, %v460
    %467 = vset.pattern.permute.xlu0 0
    %468 = vperm.xlu0 %467, %v74
    %v469 = vpop.permute.xlu0 %468
    %472 = vset.pattern.permute.xlu0 0
    %473 = vperm.xlu0 %472, %v75
    %v474 = vpop.permute.xlu0 %473
    %477 = vset.pattern.permute.xlu0 0
    %478 = vperm.xlu0 %477, %v76
    %v479 = vpop.permute.xlu0 %478
    %482 = vset.pattern.permute.xlu0 0
    %483 = vperm.xlu0 %482, %v77
    %v484 = vpop.permute.xlu0 %483
    %v486 = vmul.f32 %v462, %v469
    %v487 = vmul.f32 %v463, %v474
    %v488 = vmul.f32 %v464, %v479
    %v489 = vmul.f32 %v465, %v484
    %v490 = vadd.f32 %v486, %v487
    %v491 = vadd.f32 %v490, %v488
    %v492 = vadd.f32 %v491, %v489
    %v493 = vrot.slane %v492, 4
    %v494 = vadd.f32 %v492, %v493
    %v495 = vrot.slane %v494, 2
    %v496 = vadd.f32 %v494, %v495
    %v497 = vrot.slane %v496, 1
    %v498 = vadd.f32 %v496, %v497
    %499 = vmatpush.msra.mxu0 %v69
    %500 = vmatpush.msra.mxu0 %v68
    %501 = vmatpush.msra.mxu0 %v67
    %502 = vmatpush.msra.mxu0 %v66
    %503 = vmatpush.msra.mxu0 %v65
    %504 = vmatpush.msra.mxu0 %v64
    %505 = vmatpush.msra.mxu0 %v63
    %506 = vmatpush.msra.mxu0 %v62
    %507 = vmatpush.msra.mxu0 %v61
    %508 = vmatpush.msra.mxu0 %v60
    %509 = vmatpush.msra.mxu0 %v59
    %510 = vmatpush.msra.mxu0 %v58
    %511 = vmatpush.msra.mxu0 %v57
    %512 = vmatpush.msra.mxu0 %v56
    %513 = vmatpush.msra.mxu0 %v55
    %514 = vmatpush.msra.mxu0 %v54
    %515 = vmatmul.f32.gmra.mxu0 %v498
    %v516 = vpop.f32.mrf.mxu0
    %v517 = vadd.f32 0.0, %v516
    %518 = vdwg.mxu0
    %vm519 = vcmp.gt.f32.partialorder %v517, 0.0
    %v520 = vmul.f32 %v517, 0.2
    %v521 = vsel %vm519, %v517, %v520
    %522 = vst [vmem:[#allocation7] sm:$0x1] %v521
    // Predicated region
    $region30: #{tpu_custom_call.1} parent=1 // pred_check
      _
    $region31: #{tpu_custom_call.1} parent=1 // pred_check_branch
      %524 = sbr.rel (0) target = $region33
    $region32: #{tpu_custom_call.1} parent=1 // pred_region
      %526 = vsyncadd [#allocation4], 0
      %s528 = sshll.u32 [#allocation7], 4
      %s529 = int_to_ptr.vmem [resolvable:$true] %s528
      %s530 = sshll.u32 %s5, 4
      %s531 = int_to_ptr.hbm [resolvable:$true] %s530
      %533 = dma.vmem_to_hbm [thread:$0]  %s529, 16, %s531, [#allocation4]
    $region33: #{tpu_custom_call.1} parent=1 // pred_fallthru
      _
    // Predicated region
    $region34: #{tpu_custom_call.1} parent=1 // pred_check
      _
    $region35: #{tpu_custom_call.1} parent=1 // pred_check_branch
      %535 = sbr.rel (0) target = $region37
    $region36: #{tpu_custom_call.1} parent=1 // pred_region
      %537 = dma.done [#allocation4], 16
    $region37: #{tpu_custom_call.1} parent=1 // pred_fallthru
      _
    %538 = vsyncpa [#allocation3], 1
    %539 = vsyncpa [#allocation6], 1
    %540 = vsyncpa [#allocation4], 1

</llo_original>
